<compile_context>
chip_gen: v7x
topology: tpu7x:2x2x1
jax: 0.10.0
libtpu: 0.0.40
codegen_flags: <defaults>
</compile_context>

<pallas_src>
import functools

import jax
import jax.numpy as jnp
from jax import lax
from jax.experimental import pallas as pl
from jax.experimental.pallas import tpu as pltpu

INNER_LR = 0.01      # self.update_lr
UPDATE_STEP = 3      # args.update_step

_CONTRACT_LAST = (((1,), (1,)), ((), ()))   # contract the feature (D) axis


# ---------------------------------------------------------------------------
# Fused single-shot MAML kernel (all tasks in one grid step)
# ---------------------------------------------------------------------------
def _maml_kernel(z_ref, ysr_ref, ysc_ref, yqr_ref, b0_ref, out_ref, *,
                 task_num, setsz, querysz):
    """ONE Gram matmul over [Xs;Xq;w0] + VPU/XLU-only inner loops per task."""
    z = z_ref[...]                                              # [M, D] bf16
    # The only MXU work in the kernel: one bf16 pass, f32 accumulation.
    g = lax.dot_general(z, z, _CONTRACT_LAST,
                        preferred_element_type=jnp.float32)     # [M, M] f32

    m = task_num * (setsz + querysz) + 1
    wrow = m - 1                       # last row/col of G holds the w0 products
    b0 = b0_ref[0, 0]
    coef = INNER_LR * (2.0 / setsz)    # SGD step on the MSE gradient

    total = jnp.zeros((), jnp.float32)
    for t in range(task_num):          # static unroll; tiny O(N^2) blocks per task
        s0 = t * setsz
        q0 = task_num * setsz + t * querysz

        gss = g[s0:s0 + setsz, s0:s0 + setsz]          # Xs Xs^T    [Ns, Ns] (symmetric)
        gsq = g[s0:s0 + setsz, q0:q0 + querysz]        # Xs Xq^T    [Ns, Nq] (= Gqs^T)
        ps0_col = g[s0:s0 + setsz, wrow:wrow + 1]      # Xs w0      [Ns, 1]
        ps0_row = g[wrow:wrow + 1, s0:s0 + setsz]      # (Xs w0)^T  [1, Ns]
        pq0_row = g[wrow:wrow + 1, q0:q0 + querysz]    # (Xq w0)^T  [1, Nq]

        ys_row = ysr_ref[t]                            # [1, Ns]  lane-dense labels
        ys_col = ysc_ref[t]                            # [Ns, 1]
        yq_row = yqr_ref[t]                            # [1, Nq]

        # Fast weights w_k = w0 + Xs^T a_k (a_0 = 0).  `a` is tracked in BOTH
        # layouts so the serial-chain matvecs never touch the MXU:
        #   (Gss a) as column = sum(Gss * a_row, axis=-1)
        #   (Gss a) as row    = sum(Gss * a_col, axis=0)   (Gss symmetric)
        a_row = jnp.zeros((1, setsz), jnp.float32)
        a_col = jnp.zeros((setsz, 1), jnp.float32)
        b = b0

        for _ in range(UPDATE_STEP):                   # statically unrolled
            mv_col = jnp.sum(gss * a_row, axis=-1, keepdims=True)   # [Ns, 1]
            mv_row = jnp.sum(gss * a_col, axis=0, keepdims=True)    # [1, Ns]
            r_col = ps0_col + mv_col + b - ys_col
            r_row = ps0_row + mv_row + b - ys_row
            a_col = a_col - coef * r_col
            a_row = a_row - coef * r_row
            b = b - coef * jnp.sum(r_row)

        # Only the FINAL query loss (losses_q[-1]) is needed by the forward.
        # (Gqs a) as row = sum(Gqs^T * a_col, axis=0) = sum(gsq * a_col, axis=0).
        pq_row = pq0_row + jnp.sum(gsq * a_col, axis=0, keepdims=True) + b   # [1, Nq]
        total = total + jnp.sum((pq_row - yq_row) ** 2) / querysz

    # One fully written, lane-dense (8,128) tile -> no masked (1,1) stores.
    out_ref[...] = jnp.broadcast_to(total, (8, 128)).astype(jnp.float32)


# ---------------------------------------------------------------------------
# MAML forward (mirrors MAMLnew.forward; returns losses_q[-1] / task_num)
# ---------------------------------------------------------------------------
def maml_forward(params, x_spt, y_spt, x_qry, y_qry,
                 graph_supports, cheb_polynomials, L_tilde):
    # TODO(synk): the base spatio-temporal graph model in maml.py is not
    # defined; graph_supports / cheb_polynomials / L_tilde are accepted but
    # unused by the synthetic linear base model.
    # TODO(synk): scaler.inverse_transform is assumed identity; the outer Adam
    # step / loss_q.backward() are training-time side effects omitted here.
    # TODO(synk): losses_q[0..update_step-1] are accumulated by the PyTorch
    # forward but never used in the returned value, so they are not computed.
    del graph_supports, cheb_polynomials, L_tilde
    w0, b0 = params                              # w0: [1, D], b0: [1, 1]
    task_num, setsz = x_spt.shape[0], x_spt.shape[1]
    querysz = x_qry.shape[1]

    # Stack ALL tasks' support + query rows and w0 into one bf16 LHS for a
    # single fused Gram matmul (also halves the HBM->VMEM feature bytes).
    xs = x_spt.reshape(task_num * setsz, -1).astype(jnp.float32)
    xq = x_qry.reshape(task_num * querysz, -1).astype(jnp.float32)
    d = xs.shape[-1]
    z = jnp.concatenate([xs, xq, w0.reshape(1, d).astype(jnp.float32)],
                        axis=0).astype(jnp.bfloat16)
    m_rows = task_num * (setsz + querysz) + 1

    # Lane-dense label rows; support labels also as sublane columns for the
    # dual-layout inner loop (a few dozen bytes, one grid step total).
    ys_row = y_spt.reshape(task_num, 1, setsz).astype(jnp.float32)
    ys_col = y_spt.reshape(task_num, setsz, 1).astype(jnp.float32)
    yq_row = y_qry.reshape(task_num, 1, querysz).astype(jnp.float32)

    kernel = functools.partial(_maml_kernel, task_num=task_num,
                               setsz=setsz, querysz=querysz)

    loss_tile = pl.pallas_call(
        kernel,
        out_shape=jax.ShapeDtypeStruct((8, 128), jnp.float32),
        grid=(1,),                                   # all tasks in one step
        in_specs=[
            pl.BlockSpec((m_rows, d), lambda i: (0, 0)),                # Z (bf16)
            pl.BlockSpec((task_num, 1, setsz), lambda i: (0, 0, 0)),    # ys rows
            pl.BlockSpec((task_num, setsz, 1), lambda i: (0, 0, 0)),    # ys cols
            pl.BlockSpec((task_num, 1, querysz), lambda i: (0, 0, 0)),  # yq rows
            pl.BlockSpec(memory_space=pltpu.MemorySpace.SMEM),          # b0 scalar
        ],
        out_specs=pl.BlockSpec((8, 128), lambda i: (0, 0)),
        compiler_params=pltpu.CompilerParams(
            dimension_semantics=("arbitrary",)),
    )(z, ys_row, ys_col, yq_row, b0)

    # losses_q[-1] / task_num  (the only value MAMLnew.forward returns)
    return loss_tile[0, 0] / task_num


# ---------------------------------------------------------------------------
# Pure-JAX direct (non-Gram) reference for correctness checking.
# Matches the kernel's bf16 MXU-operand quantization; all other math f32.
# ---------------------------------------------------------------------------
def _maml_forward_ref(params, x_spt, y_spt, x_qry, y_qry):
    w0, b0 = params
    hp = jax.lax.Precision.HIGHEST
    q = lambda a: a.astype(jnp.bfloat16).astype(jnp.float32)
    task_num, setsz = x_spt.shape[0], x_spt.shape[1]
    querysz = x_qry.shape[1]
    total = jnp.zeros((), jnp.float32)
    for i in range(task_num):
        xs = q(x_spt[i].reshape(setsz, -1).astype(jnp.float32))
        ys = y_spt[i].reshape(setsz, 1).astype(jnp.float32)
        xq = q(x_qry[i].reshape(querysz, -1).astype(jnp.float32))
        yq = y_qry[i].reshape(querysz, 1).astype(jnp.float32)
        w = q(w0.astype(jnp.float32)).reshape(-1, 1)
        b = b0[0, 0]
        for _ in range(UPDATE_STEP):
            r = jnp.dot(xs, w, precision=hp) + b - ys
            w = w - INNER_LR * (2.0 / setsz) * jnp.dot(xs.T, r, precision=hp)
            b = b - INNER_LR * (2.0 / setsz) * jnp.sum(r)
        pred_q = jnp.dot(xq, w, precision=hp) + b
        total = total + jnp.mean((pred_q - yq) ** 2)
    return total / task_num


# ---------------------------------------------------------------------------
# main
# ---------------------------------------------------------------------------
if __name__ == "__main__":
    key = jax.random.PRNGKey(0)
    k1, k2, k3, k4, k5 = jax.random.split(key, 5)

    TASKS, SETSZ, QRYSZ = 2, 4, 4
    C, H, W = 4, 16, 16
    D = C * H * W
    NODES = 16

    x_spt = jax.random.normal(k1, (TASKS, SETSZ, C, H, W), jnp.float32)
    y_spt = jax.random.normal(k2, (TASKS, SETSZ), jnp.float32)
    x_qry = jax.random.normal(k3, (TASKS, QRYSZ, C, H, W), jnp.float32)
    y_qry = jax.random.normal(k4, (TASKS, QRYSZ), jnp.float32)

    # graph tensors (pass-through; the unspecified base model would consume them)
    graph_supports = jnp.eye(NODES, dtype=jnp.float32)
    cheb_polynomials = jnp.stack([jnp.eye(NODES, dtype=jnp.float32)] * 3)
    L_tilde = jnp.eye(NODES, dtype=jnp.float32)

    # lane-dense [1, D] weight row + scalar bias for the synthetic base model
    w0 = (jax.random.normal(k5, (1, D), jnp.float32) * 0.02).astype(jnp.float32)
    b0 = jnp.zeros((1, 1), jnp.float32)

    fwd = jax.jit(maml_forward)
    loss_q = fwd((w0, b0), x_spt, y_spt, x_qry, y_qry,
                 graph_supports, cheb_polynomials, L_tilde)
    loss_q = jax.block_until_ready(loss_q)

    ref = _maml_forward_ref((w0, b0), x_spt, y_spt, x_qry, y_qry)
    assert jnp.isfinite(loss_q)
    # Both paths quantize the D=1024 contraction operands to bf16 (f32 accum),
    # so agreement is well inside 2e-3.
    assert jnp.allclose(loss_q, ref, rtol=2e-3, atol=2e-3), (loss_q, ref)
    print("KERNEL_OK")
</pallas_src>

<mosaic_0001>
module attributes {stable_mosaic.version = 11 : i64} {
  func.func @_maml_kernel(%arg0: i32, %arg1: memref<17x1024xbf16, #tpu.memory_space<vmem>>, %arg2: memref<2x1x4xf32, #tpu.memory_space<vmem>>, %arg3: memref<2x4x1xf32, #tpu.memory_space<vmem>>, %arg4: memref<2x1x4xf32, #tpu.memory_space<vmem>>, %arg5: memref<1x1xf32, #tpu.memory_space<smem>>, %arg6: memref<8x128xf32, #tpu.memory_space<vmem>>) attributes {dimension_semantics = [#tpu.dimension_semantics<arbitrary>], iteration_bounds = array<i64: 1>, scalar_prefetch = 0 : i64, scratch_operands = 0 : i64, tpu.core_type = #tpu.core_type<tc>, window_params = [{pipeline_mode = #tpu.pipeline_mode<synchronous>, transform_indices = @transform_0, window_bounds = array<i64: 17, 1024>}, {pipeline_mode = #tpu.pipeline_mode<synchronous>, transform_indices = @transform_1, window_bounds = array<i64: 2, 1, 4>}, {pipeline_mode = #tpu.pipeline_mode<synchronous>, transform_indices = @transform_2, window_bounds = array<i64: 2, 4, 1>}, {pipeline_mode = #tpu.pipeline_mode<synchronous>, transform_indices = @transform_3, window_bounds = array<i64: 2, 1, 4>}, {transform_indices = @transform_4, window_bounds = array<i64: 1, 1>}, {pipeline_mode = #tpu.pipeline_mode<synchronous>, transform_indices = @transform_5, window_bounds = array<i64: 8, 128>}]} {
    %c0 = arith.constant 0 : index
    %c0_0 = arith.constant 0 : index
    %0 = vector.load %arg1[%c0, %c0_0] : memref<17x1024xbf16, #tpu.memory_space<vmem>>, vector<17x1024xbf16>
    %cst = arith.constant dense<0.000000e+00> : vector<17x17xf32>
    %1 = tpu.matmul %0, %0, %cst {dimension_numbers = #tpu.dot_dimension_numbers<[1], [1], [0], [0], [0, 0, 1, 0], [], []>} : vector<17x1024xbf16>, vector<17x1024xbf16>, vector<17x17xf32> -> vector<17x17xf32>
    %c0_1 = arith.constant 0 : index
    %c0_2 = arith.constant 0 : index
    %2 = memref.load %arg5[%c0_1, %c0_2] : memref<1x1xf32, #tpu.memory_space<smem>>
    %3 = vector.extract_strided_slice %1 {offsets = [0, 0], sizes = [4, 4], strides = [1, 1]} : vector<17x17xf32> to vector<4x4xf32>
    %4 = vector.extract_strided_slice %1 {offsets = [0, 8], sizes = [4, 4], strides = [1, 1]} : vector<17x17xf32> to vector<4x4xf32>
    %5 = vector.extract_strided_slice %1 {offsets = [0, 16], sizes = [4, 1], strides = [1, 1]} : vector<17x17xf32> to vector<4x1xf32>
    %6 = vector.extract_strided_slice %1 {offsets = [16, 0], sizes = [1, 4], strides = [1, 1]} : vector<17x17xf32> to vector<1x4xf32>
    %7 = vector.extract_strided_slice %1 {offsets = [16, 8], sizes = [1, 4], strides = [1, 1]} : vector<17x17xf32> to vector<1x4xf32>
    %c0_3 = arith.constant 0 : index
    %c0_4 = arith.constant 0 : index
    %c0_5 = arith.constant 0 : index
    %8 = vector.load %arg2[%c0_3, %c0_4, %c0_5] : memref<2x1x4xf32, #tpu.memory_space<vmem>>, vector<1x1x4xf32>
    %9 = vector.shape_cast %8 : vector<1x1x4xf32> to vector<1x4xf32>
    %c0_6 = arith.constant 0 : index
    %c0_7 = arith.constant 0 : index
    %c0_8 = arith.constant 0 : index
    %10 = vector.load %arg3[%c0_6, %c0_7, %c0_8] : memref<2x4x1xf32, #tpu.memory_space<vmem>>, vector<1x4x1xf32>
    %11 = vector.shape_cast %10 : vector<1x4x1xf32> to vector<4x1xf32>
    %c0_9 = arith.constant 0 : index
    %c0_10 = arith.constant 0 : index
    %c0_11 = arith.constant 0 : index
    %12 = vector.load %arg4[%c0_9, %c0_10, %c0_11] : memref<2x1x4xf32, #tpu.memory_space<vmem>>, vector<1x1x4xf32>
    %13 = vector.shape_cast %12 : vector<1x1x4xf32> to vector<1x4xf32>
    %cst_12 = arith.constant 0.000000e+00 : f32
    %14 = vector.broadcast %cst_12 : f32 to vector<1x4xf32>
    %cst_13 = arith.constant 0.000000e+00 : f32
    %15 = vector.broadcast %cst_13 : f32 to vector<4x1xf32>
    %16 = vector.broadcast %14 : vector<1x4xf32> to vector<4x4xf32>
    %17 = arith.mulf %3, %16 : vector<4x4xf32>
    %cst_14 = arith.constant dense<0.000000e+00> : vector<4xf32>
    %18 = vector.multi_reduction <add>, %17, %cst_14 [1] : vector<4x4xf32> to vector<4xf32>
    %19 = vector.shape_cast %18 : vector<4xf32> to vector<4x1xf32>
    %20 = vector.broadcast %15 : vector<4x1xf32> to vector<4x4xf32>
    %21 = arith.mulf %3, %20 : vector<4x4xf32>
    %cst_15 = arith.constant dense<0.000000e+00> : vector<4xf32>
    %22 = vector.multi_reduction <add>, %21, %cst_15 [0] : vector<4x4xf32> to vector<4xf32>
    %23 = vector.shape_cast %22 : vector<4xf32> to vector<1x4xf32>
    %24 = arith.addf %5, %19 : vector<4x1xf32>
    %25 = vector.broadcast %2 : f32 to vector<4x1xf32>
    %26 = arith.addf %24, %25 : vector<4x1xf32>
    %27 = arith.subf %26, %11 : vector<4x1xf32>
    %28 = arith.addf %6, %23 : vector<1x4xf32>
    %29 = vector.broadcast %2 : f32 to vector<1x4xf32>
    %30 = arith.addf %28, %29 : vector<1x4xf32>
    %31 = arith.subf %30, %9 : vector<1x4xf32>
    %cst_16 = arith.constant 5.000000e-03 : f32
    %32 = vector.broadcast %cst_16 : f32 to vector<4x1xf32>
    %33 = arith.mulf %32, %27 : vector<4x1xf32>
    %34 = arith.subf %15, %33 : vector<4x1xf32>
    %cst_17 = arith.constant 5.000000e-03 : f32
    %35 = vector.broadcast %cst_17 : f32 to vector<1x4xf32>
    %36 = arith.mulf %35, %31 : vector<1x4xf32>
    %37 = arith.subf %14, %36 : vector<1x4xf32>
    %38 = vector.shape_cast %31 : vector<1x4xf32> to vector<1x1x4xf32>
    %cst_18 = arith.constant dense<0.000000e+00> : vector<1xf32>
    %39 = vector.multi_reduction <add>, %38, %cst_18 [1, 2] : vector<1x1x4xf32> to vector<1xf32>
    %40 = vector.shape_cast %39 : vector<1xf32> to vector<1x1x1xf32>
    %41 = vector.extract %40[0, 0, 0] : f32 from vector<1x1x1xf32>
    %cst_19 = arith.constant 5.000000e-03 : f32
    %42 = arith.mulf %cst_19, %41 : f32
    %43 = arith.subf %2, %42 : f32
    %44 = vector.broadcast %37 : vector<1x4xf32> to vector<4x4xf32>
    %45 = arith.mulf %3, %44 : vector<4x4xf32>
    %cst_20 = arith.constant dense<0.000000e+00> : vector<4xf32>
    %46 = vector.multi_reduction <add>, %45, %cst_20 [1] : vector<4x4xf32> to vector<4xf32>
    %47 = vector.shape_cast %46 : vector<4xf32> to vector<4x1xf32>
    %48 = vector.broadcast %34 : vector<4x1xf32> to vector<4x4xf32>
    %49 = arith.mulf %3, %48 : vector<4x4xf32>
    %cst_21 = arith.constant dense<0.000000e+00> : vector<4xf32>
    %50 = vector.multi_reduction <add>, %49, %cst_21 [0] : vector<4x4xf32> to vector<4xf32>
    %51 = vector.shape_cast %50 : vector<4xf32> to vector<1x4xf32>
    %52 = arith.addf %5, %47 : vector<4x1xf32>
    %53 = vector.broadcast %43 : f32 to vector<4x1xf32>
    %54 = arith.addf %52, %53 : vector<4x1xf32>
    %55 = arith.subf %54, %11 : vector<4x1xf32>
    %56 = arith.addf %6, %51 : vector<1x4xf32>
    %57 = vector.broadcast %43 : f32 to vector<1x4xf32>
    %58 = arith.addf %56, %57 : vector<1x4xf32>
    %59 = arith.subf %58, %9 : vector<1x4xf32>
    %cst_22 = arith.constant 5.000000e-03 : f32
    %60 = vector.broadcast %cst_22 : f32 to vector<4x1xf32>
    %61 = arith.mulf %60, %55 : vector<4x1xf32>
    %62 = arith.subf %34, %61 : vector<4x1xf32>
    %cst_23 = arith.constant 5.000000e-03 : f32
    %63 = vector.broadcast %cst_23 : f32 to vector<1x4xf32>
    %64 = arith.mulf %63, %59 : vector<1x4xf32>
    %65 = arith.subf %37, %64 : vector<1x4xf32>
    %66 = vector.shape_cast %59 : vector<1x4xf32> to vector<1x1x4xf32>
    %cst_24 = arith.constant dense<0.000000e+00> : vector<1xf32>
    %67 = vector.multi_reduction <add>, %66, %cst_24 [1, 2] : vector<1x1x4xf32> to vector<1xf32>
    %68 = vector.shape_cast %67 : vector<1xf32> to vector<1x1x1xf32>
    %69 = vector.extract %68[0, 0, 0] : f32 from vector<1x1x1xf32>
    %cst_25 = arith.constant 5.000000e-03 : f32
    %70 = arith.mulf %cst_25, %69 : f32
    %71 = arith.subf %43, %70 : f32
    %72 = vector.broadcast %65 : vector<1x4xf32> to vector<4x4xf32>
    %73 = arith.mulf %3, %72 : vector<4x4xf32>
    %cst_26 = arith.constant dense<0.000000e+00> : vector<4xf32>
    %74 = vector.multi_reduction <add>, %73, %cst_26 [1] : vector<4x4xf32> to vector<4xf32>
    %75 = vector.shape_cast %74 : vector<4xf32> to vector<4x1xf32>
    %76 = vector.broadcast %62 : vector<4x1xf32> to vector<4x4xf32>
    %77 = arith.mulf %3, %76 : vector<4x4xf32>
    %cst_27 = arith.constant dense<0.000000e+00> : vector<4xf32>
    %78 = vector.multi_reduction <add>, %77, %cst_27 [0] : vector<4x4xf32> to vector<4xf32>
    %79 = vector.shape_cast %78 : vector<4xf32> to vector<1x4xf32>
    %80 = arith.addf %5, %75 : vector<4x1xf32>
    %81 = vector.broadcast %71 : f32 to vector<4x1xf32>
    %82 = arith.addf %80, %81 : vector<4x1xf32>
    %83 = arith.subf %82, %11 : vector<4x1xf32>
    %84 = arith.addf %6, %79 : vector<1x4xf32>
    %85 = vector.broadcast %71 : f32 to vector<1x4xf32>
    %86 = arith.addf %84, %85 : vector<1x4xf32>
    %87 = arith.subf %86, %9 : vector<1x4xf32>
    %cst_28 = arith.constant 5.000000e-03 : f32
    %88 = vector.broadcast %cst_28 : f32 to vector<4x1xf32>
    %89 = arith.mulf %88, %83 : vector<4x1xf32>
    %90 = arith.subf %62, %89 : vector<4x1xf32>
    %91 = vector.shape_cast %87 : vector<1x4xf32> to vector<1x1x4xf32>
    %cst_29 = arith.constant dense<0.000000e+00> : vector<1xf32>
    %92 = vector.multi_reduction <add>, %91, %cst_29 [1, 2] : vector<1x1x4xf32> to vector<1xf32>
    %93 = vector.shape_cast %92 : vector<1xf32> to vector<1x1x1xf32>
    %94 = vector.extract %93[0, 0, 0] : f32 from vector<1x1x1xf32>
    %cst_30 = arith.constant 5.000000e-03 : f32
    %95 = arith.mulf %cst_30, %94 : f32
    %96 = arith.subf %71, %95 : f32
    %97 = vector.broadcast %90 : vector<4x1xf32> to vector<4x4xf32>
    %98 = arith.mulf %4, %97 : vector<4x4xf32>
    %cst_31 = arith.constant dense<0.000000e+00> : vector<4xf32>
    %99 = vector.multi_reduction <add>, %98, %cst_31 [0] : vector<4x4xf32> to vector<4xf32>
    %100 = vector.shape_cast %99 : vector<4xf32> to vector<1x4xf32>
    %101 = arith.addf %7, %100 : vector<1x4xf32>
    %102 = vector.broadcast %96 : f32 to vector<1x4xf32>
    %103 = arith.addf %101, %102 : vector<1x4xf32>
    %104 = arith.subf %103, %13 : vector<1x4xf32>
    %105 = arith.mulf %104, %104 : vector<1x4xf32>
    %106 = vector.shape_cast %105 : vector<1x4xf32> to vector<1x1x4xf32>
    %cst_32 = arith.constant dense<0.000000e+00> : vector<1xf32>
    %107 = vector.multi_reduction <add>, %106, %cst_32 [1, 2] : vector<1x1x4xf32> to vector<1xf32>
    %108 = vector.shape_cast %107 : vector<1xf32> to vector<1x1x1xf32>
    %109 = vector.extract %108[0, 0, 0] : f32 from vector<1x1x1xf32>
    %cst_33 = arith.constant 4.000000e+00 : f32
    %110 = arith.divf %109, %cst_33 : f32
    %cst_34 = arith.constant 0.000000e+00 : f32
    %111 = arith.addf %cst_34, %110 : f32
    %112 = vector.extract_strided_slice %1 {offsets = [4, 4], sizes = [4, 4], strides = [1, 1]} : vector<17x17xf32> to vector<4x4xf32>
    %113 = vector.extract_strided_slice %1 {offsets = [4, 12], sizes = [4, 4], strides = [1, 1]} : vector<17x17xf32> to vector<4x4xf32>
    %114 = vector.extract_strided_slice %1 {offsets = [4, 16], sizes = [4, 1], strides = [1, 1]} : vector<17x17xf32> to vector<4x1xf32>
    %115 = vector.extract_strided_slice %1 {offsets = [16, 4], sizes = [1, 4], strides = [1, 1]} : vector<17x17xf32> to vector<1x4xf32>
    %116 = vector.extract_strided_slice %1 {offsets = [16, 12], sizes = [1, 4], strides = [1, 1]} : vector<17x17xf32> to vector<1x4xf32>
    %c1 = arith.constant 1 : index
    %c0_35 = arith.constant 0 : index
    %c0_36 = arith.constant 0 : index
    %117 = vector.load %arg2[%c1, %c0_35, %c0_36] : memref<2x1x4xf32, #tpu.memory_space<vmem>>, vector<1x1x4xf32>
    %118 = vector.shape_cast %117 : vector<1x1x4xf32> to vector<1x4xf32>
    %c1_37 = arith.constant 1 : index
    %c0_38 = arith.constant 0 : index
    %c0_39 = arith.constant 0 : index
    %119 = vector.load %arg3[%c1_37, %c0_38, %c0_39] : memref<2x4x1xf32, #tpu.memory_space<vmem>>, vector<1x4x1xf32>
    %120 = vector.shape_cast %119 : vector<1x4x1xf32> to vector<4x1xf32>
    %c1_40 = arith.constant 1 : index
    %c0_41 = arith.constant 0 : index
    %c0_42 = arith.constant 0 : index
    %121 = vector.load %arg4[%c1_40, %c0_41, %c0_42] : memref<2x1x4xf32, #tpu.memory_space<vmem>>, vector<1x1x4xf32>
    %122 = vector.shape_cast %121 : vector<1x1x4xf32> to vector<1x4xf32>
    %cst_43 = arith.constant 0.000000e+00 : f32
    %123 = vector.broadcast %cst_43 : f32 to vector<1x4xf32>
    %cst_44 = arith.constant 0.000000e+00 : f32
    %124 = vector.broadcast %cst_44 : f32 to vector<4x1xf32>
    %125 = vector.broadcast %123 : vector<1x4xf32> to vector<4x4xf32>
    %126 = arith.mulf %112, %125 : vector<4x4xf32>
    %cst_45 = arith.constant dense<0.000000e+00> : vector<4xf32>
    %127 = vector.multi_reduction <add>, %126, %cst_45 [1] : vector<4x4xf32> to vector<4xf32>
    %128 = vector.shape_cast %127 : vector<4xf32> to vector<4x1xf32>
    %129 = vector.broadcast %124 : vector<4x1xf32> to vector<4x4xf32>
    %130 = arith.mulf %112, %129 : vector<4x4xf32>
    %cst_46 = arith.constant dense<0.000000e+00> : vector<4xf32>
    %131 = vector.multi_reduction <add>, %130, %cst_46 [0] : vector<4x4xf32> to vector<4xf32>
    %132 = vector.shape_cast %131 : vector<4xf32> to vector<1x4xf32>
    %133 = arith.addf %114, %128 : vector<4x1xf32>
    %134 = vector.broadcast %2 : f32 to vector<4x1xf32>
    %135 = arith.addf %133, %134 : vector<4x1xf32>
    %136 = arith.subf %135, %120 : vector<4x1xf32>
    %137 = arith.addf %115, %132 : vector<1x4xf32>
    %138 = vector.broadcast %2 : f32 to vector<1x4xf32>
    %139 = arith.addf %137, %138 : vector<1x4xf32>
    %140 = arith.subf %139, %118 : vector<1x4xf32>
    %cst_47 = arith.constant 5.000000e-03 : f32
    %141 = vector.broadcast %cst_47 : f32 to vector<4x1xf32>
    %142 = arith.mulf %141, %136 : vector<4x1xf32>
    %143 = arith.subf %124, %142 : vector<4x1xf32>
    %cst_48 = arith.constant 5.000000e-03 : f32
    %144 = vector.broadcast %cst_48 : f32 to vector<1x4xf32>
    %145 = arith.mulf %144, %140 : vector<1x4xf32>
    %146 = arith.subf %123, %145 : vector<1x4xf32>
    %147 = vector.shape_cast %140 : vector<1x4xf32> to vector<1x1x4xf32>
    %cst_49 = arith.constant dense<0.000000e+00> : vector<1xf32>
    %148 = vector.multi_reduction <add>, %147, %cst_49 [1, 2] : vector<1x1x4xf32> to vector<1xf32>
    %149 = vector.shape_cast %148 : vector<1xf32> to vector<1x1x1xf32>
    %150 = vector.extract %149[0, 0, 0] : f32 from vector<1x1x1xf32>
    %cst_50 = arith.constant 5.000000e-03 : f32
    %151 = arith.mulf %cst_50, %150 : f32
    %152 = arith.subf %2, %151 : f32
    %153 = vector.broadcast %146 : vector<1x4xf32> to vector<4x4xf32>
    %154 = arith.mulf %112, %153 : vector<4x4xf32>
    %cst_51 = arith.constant dense<0.000000e+00> : vector<4xf32>
    %155 = vector.multi_reduction <add>, %154, %cst_51 [1] : vector<4x4xf32> to vector<4xf32>
    %156 = vector.shape_cast %155 : vector<4xf32> to vector<4x1xf32>
    %157 = vector.broadcast %143 : vector<4x1xf32> to vector<4x4xf32>
    %158 = arith.mulf %112, %157 : vector<4x4xf32>
    %cst_52 = arith.constant dense<0.000000e+00> : vector<4xf32>
    %159 = vector.multi_reduction <add>, %158, %cst_52 [0] : vector<4x4xf32> to vector<4xf32>
    %160 = vector.shape_cast %159 : vector<4xf32> to vector<1x4xf32>
    %161 = arith.addf %114, %156 : vector<4x1xf32>
    %162 = vector.broadcast %152 : f32 to vector<4x1xf32>
    %163 = arith.addf %161, %162 : vector<4x1xf32>
    %164 = arith.subf %163, %120 : vector<4x1xf32>
    %165 = arith.addf %115, %160 : vector<1x4xf32>
    %166 = vector.broadcast %152 : f32 to vector<1x4xf32>
    %167 = arith.addf %165, %166 : vector<1x4xf32>
    %168 = arith.subf %167, %118 : vector<1x4xf32>
    %cst_53 = arith.constant 5.000000e-03 : f32
    %169 = vector.broadcast %cst_53 : f32 to vector<4x1xf32>
    %170 = arith.mulf %169, %164 : vector<4x1xf32>
    %171 = arith.subf %143, %170 : vector<4x1xf32>
    %cst_54 = arith.constant 5.000000e-03 : f32
    %172 = vector.broadcast %cst_54 : f32 to vector<1x4xf32>
    %173 = arith.mulf %172, %168 : vector<1x4xf32>
    %174 = arith.subf %146, %173 : vector<1x4xf32>
    %175 = vector.shape_cast %168 : vector<1x4xf32> to vector<1x1x4xf32>
    %cst_55 = arith.constant dense<0.000000e+00> : vector<1xf32>
    %176 = vector.multi_reduction <add>, %175, %cst_55 [1, 2] : vector<1x1x4xf32> to vector<1xf32>
    %177 = vector.shape_cast %176 : vector<1xf32> to vector<1x1x1xf32>
    %178 = vector.extract %177[0, 0, 0] : f32 from vector<1x1x1xf32>
    %cst_56 = arith.constant 5.000000e-03 : f32
    %179 = arith.mulf %cst_56, %178 : f32
    %180 = arith.subf %152, %179 : f32
    %181 = vector.broadcast %174 : vector<1x4xf32> to vector<4x4xf32>
    %182 = arith.mulf %112, %181 : vector<4x4xf32>
    %cst_57 = arith.constant dense<0.000000e+00> : vector<4xf32>
    %183 = vector.multi_reduction <add>, %182, %cst_57 [1] : vector<4x4xf32> to vector<4xf32>
    %184 = vector.shape_cast %183 : vector<4xf32> to vector<4x1xf32>
    %185 = vector.broadcast %171 : vector<4x1xf32> to vector<4x4xf32>
    %186 = arith.mulf %112, %185 : vector<4x4xf32>
    %cst_58 = arith.constant dense<0.000000e+00> : vector<4xf32>
    %187 = vector.multi_reduction <add>, %186, %cst_58 [0] : vector<4x4xf32> to vector<4xf32>
    %188 = vector.shape_cast %187 : vector<4xf32> to vector<1x4xf32>
    %189 = arith.addf %114, %184 : vector<4x1xf32>
    %190 = vector.broadcast %180 : f32 to vector<4x1xf32>
    %191 = arith.addf %189, %190 : vector<4x1xf32>
    %192 = arith.subf %191, %120 : vector<4x1xf32>
    %193 = arith.addf %115, %188 : vector<1x4xf32>
    %194 = vector.broadcast %180 : f32 to vector<1x4xf32>
    %195 = arith.addf %193, %194 : vector<1x4xf32>
    %196 = arith.subf %195, %118 : vector<1x4xf32>
    %cst_59 = arith.constant 5.000000e-03 : f32
    %197 = vector.broadcast %cst_59 : f32 to vector<4x1xf32>
    %198 = arith.mulf %197, %192 : vector<4x1xf32>
    %199 = arith.subf %171, %198 : vector<4x1xf32>
    %200 = vector.shape_cast %196 : vector<1x4xf32> to vector<1x1x4xf32>
    %cst_60 = arith.constant dense<0.000000e+00> : vector<1xf32>
    %201 = vector.multi_reduction <add>, %200, %cst_60 [1, 2] : vector<1x1x4xf32> to vector<1xf32>
    %202 = vector.shape_cast %201 : vector<1xf32> to vector<1x1x1xf32>
    %203 = vector.extract %202[0, 0, 0] : f32 from vector<1x1x1xf32>
    %cst_61 = arith.constant 5.000000e-03 : f32
    %204 = arith.mulf %cst_61, %203 : f32
    %205 = arith.subf %180, %204 : f32
    %206 = vector.broadcast %199 : vector<4x1xf32> to vector<4x4xf32>
    %207 = arith.mulf %113, %206 : vector<4x4xf32>
    %cst_62 = arith.constant dense<0.000000e+00> : vector<4xf32>
    %208 = vector.multi_reduction <add>, %207, %cst_62 [0] : vector<4x4xf32> to vector<4xf32>
    %209 = vector.shape_cast %208 : vector<4xf32> to vector<1x4xf32>
    %210 = arith.addf %116, %209 : vector<1x4xf32>
    %211 = vector.broadcast %205 : f32 to vector<1x4xf32>
    %212 = arith.addf %210, %211 : vector<1x4xf32>
    %213 = arith.subf %212, %122 : vector<1x4xf32>
    %214 = arith.mulf %213, %213 : vector<1x4xf32>
    %215 = vector.shape_cast %214 : vector<1x4xf32> to vector<1x1x4xf32>
    %cst_63 = arith.constant dense<0.000000e+00> : vector<1xf32>
    %216 = vector.multi_reduction <add>, %215, %cst_63 [1, 2] : vector<1x1x4xf32> to vector<1xf32>
    %217 = vector.shape_cast %216 : vector<1xf32> to vector<1x1x1xf32>
    %218 = vector.extract %217[0, 0, 0] : f32 from vector<1x1x1xf32>
    %cst_64 = arith.constant 4.000000e+00 : f32
    %219 = arith.divf %218, %cst_64 : f32
    %220 = arith.addf %111, %219 : f32
    %221 = vector.broadcast %220 : f32 to vector<8x128xf32>
    %c0_65 = arith.constant 0 : index
    %c0_66 = arith.constant 0 : index
    %222 = vector.load %arg6[%c0_65, %c0_66] : memref<8x128xf32, #tpu.memory_space<vmem>>, vector<8x128xf32>
    tpu.vector_store %arg6[%c0_65, %c0_66], %221 {strides = array<i32>} : memref<8x128xf32, #tpu.memory_space<vmem>>, vector<8x128xf32>,
    return
  }
  func.func @transform_0(%arg0: i32) -> (i32, i32) {
    %c0_i32 = arith.constant 0 : i32
    %c0_i32_0 = arith.constant 0 : i32
    %c0_i32_1 = arith.constant 0 : i32
    return %c0_i32, %c0_i32_0 : i32, i32
  }
  func.func @transform_1(%arg0: i32) -> (i32, i32, i32) {
    %c0_i32 = arith.constant 0 : i32
    %c0_i32_0 = arith.constant 0 : i32
    %c0_i32_1 = arith.constant 0 : i32
    %c0_i32_2 = arith.constant 0 : i32
    return %c0_i32, %c0_i32_0, %c0_i32_1 : i32, i32, i32
  }
  func.func @transform_2(%arg0: i32) -> (i32, i32, i32) {
    %c0_i32 = arith.constant 0 : i32
    %c0_i32_0 = arith.constant 0 : i32
    %c0_i32_1 = arith.constant 0 : i32
    %c0_i32_2 = arith.constant 0 : i32
    return %c0_i32, %c0_i32_0, %c0_i32_1 : i32, i32, i32
  }
  func.func @transform_3(%arg0: i32) -> (i32, i32, i32) {
    %c0_i32 = arith.constant 0 : i32
    %c0_i32_0 = arith.constant 0 : i32
    %c0_i32_1 = arith.constant 0 : i32
    %c0_i32_2 = arith.constant 0 : i32
    return %c0_i32, %c0_i32_0, %c0_i32_1 : i32, i32, i32
  }
  func.func @transform_4(%arg0: i32) -> (i32, i32) {
    %c0_i32 = arith.constant 0 : i32
    %c0_i32_0 = arith.constant 0 : i32
    %c0_i32_1 = arith.constant 0 : i32
    return %c0_i32, %c0_i32_0 : i32, i32
  }
  func.func @transform_5(%arg0: i32) -> (i32, i32) {
    %c0_i32 = arith.constant 0 : i32
    %c0_i32_0 = arith.constant 0 : i32
    %c0_i32_1 = arith.constant 0 : i32
    return %c0_i32, %c0_i32_0 : i32, i32
  }
}

</mosaic_0001>

<llo_original>
// kernel: maml_forward.1
$region0: #{maml_forward.1}
  #allocation0 [shape = 'u32[]', space=smem, size = 0x4, offset = 0x4, fixed_abs, tag = 'smem constant byte address 0x4 - core index']
  #allocation1 [shape = 'u32[144,128]{1,0:T(1,128)}', space=vmem, size = 0x12000, scoped, tag = 'internal scratch']
  #allocation2 [shape = 'f32[1,1]{1,0:T(1,128)S(6)}', space=smem, size = 0x200, scoped, tag = 'scoped memory for maml_forward.1']
  %s0 = inlined_call_operand.vmem [shape: bf16[17,1024], index: 0, kind: input, shape index: {}]
  %s1 = inlined_call_operand.vmem [shape: f32[2,1,4], index: 1, kind: input, shape index: {}]
  %s2 = inlined_call_operand.vmem [shape: f32[2,4,1], index: 2, kind: input, shape index: {}]
  %s3 = inlined_call_operand.vmem [shape: f32[2,1,4], index: 3, kind: input, shape index: {}]
  %s4 = inlined_call_operand.<no memory space> [shape: f32[1,1], index: 4, kind: input, shape index: {}]
  %s5 = inlined_call_operand.vmem [shape: f32[8,128], index: 5, kind: output, shape index: {}]
  %s6 = sld [smem:[#allocation0]]
  $region30: #{maml_forward.1} parent=0
    _
  %s8 = ssub.s32 1, %s6
  %s9 = scalar_select 0, %s8, %s6
  %10 = sst [smem:[#allocation2]] %s4
  // Predicated region
  $region2: #{maml_forward.1} parent=0 // pred_check
    _
  $region3: #{maml_forward.1} parent=0 // pred_check_branch
    %12 = sbr.rel (0) target = $region5
  $region4: #{maml_forward.1} parent=0 // pred_region
    _
  $region5: #{maml_forward.1} parent=0 // pred_fallthru
    _
  // Predicated region
  $region6: #{maml_forward.1} parent=0 // pred_check
    _
  $region7: #{maml_forward.1} parent=0 // pred_check_branch
    %14 = sbr.rel (0) target = $region9
  $region8: #{maml_forward.1} parent=0 // pred_region
    _
  $region9: #{maml_forward.1} parent=0 // pred_fallthru
    _
  // Predicated region
  $region10: #{maml_forward.1} parent=0 // pred_check
    _
  $region11: #{maml_forward.1} parent=0 // pred_check_branch
    %16 = sbr.rel (0) target = $region13
  $region12: #{maml_forward.1} parent=0 // pred_region
    _
  $region13: #{maml_forward.1} parent=0 // pred_fallthru
    _
  // Predicated region
  $region14: #{maml_forward.1} parent=0 // pred_check
    _
  $region15: #{maml_forward.1} parent=0 // pred_check_branch
    %18 = sbr.rel (0) target = $region17
  $region16: #{maml_forward.1} parent=0 // pred_region
    _
  $region17: #{maml_forward.1} parent=0 // pred_fallthru
    _
  // Predicated region
  $region18: #{maml_forward.1} parent=0 // pred_check
    _
  $region19: #{maml_forward.1} parent=0 // pred_check_branch
    %20 = sbr.rel (0) target = $region21
  $region20: #{maml_forward.1} parent=0 // pred_region
    _
  $region21: #{maml_forward.1} parent=0 // pred_fallthru
    _
  %v22 = vld [vmem:[%s0] sm:$0xff]
  %v23 = vld [vmem:[%s0 + $0x8] sm:$0xff]
  %v24 = vld [vmem:[%s0 + $0x10] sm:$0xff]
  %v25 = vld [vmem:[%s0 + $0x18] sm:$0xff]
  %v26 = vld [vmem:[%s0 + $0x20] sm:$0xff]
  %v27 = vld [vmem:[%s0 + $0x28] sm:$0xff]
  %v28 = vld [vmem:[%s0 + $0x30] sm:$0xff]
  %v29 = vld [vmem:[%s0 + $0x38] sm:$0xff]
  %v30 = vld [vmem:[%s0 + $0x40] sm:$0x11]
  %v31 = vld [vmem:[%s0 + $0x48] sm:$0x11]
  %v32 = vld [vmem:[%s0 + $0x50] sm:$0x11]
  %v33 = vld [vmem:[%s0 + $0x58] sm:$0x11]
  %v46 = vunpack.c.l.b16 %v22
  %v47 = vunpack.c.h.b16 %v22
  %v48 = vunpack.c.l.b16 %v23
  %v49 = vunpack.c.h.b16 %v23
  %v50 = vunpack.c.l.b16 %v24
  %v51 = vunpack.c.h.b16 %v24
  %v52 = vunpack.c.l.b16 %v25
  %v53 = vunpack.c.h.b16 %v25
  %v54 = vunpack.c.l.b16 %v26
  %v55 = vunpack.c.h.b16 %v26
  %v56 = vunpack.c.l.b16 %v27
  %v57 = vunpack.c.h.b16 %v27
  %v58 = vunpack.c.l.b16 %v28
  %v59 = vunpack.c.h.b16 %v28
  %v60 = vunpack.c.l.b16 %v29
  %v61 = vunpack.c.h.b16 %v29
  %v62 = vunpack.c.l.b16 %v30
  %v63 = vunpack.c.h.b16 %v30
  %v64 = vunpack.c.l.b16 %v31
  %v65 = vunpack.c.h.b16 %v31
  %v66 = vunpack.c.l.b16 %v32
  %v67 = vunpack.c.h.b16 %v32
  %v68 = vunpack.c.l.b16 %v33
  %v69 = vunpack.c.h.b16 %v33
  %v70 = vpack.c.b16 %v54, %v46
  %v71 = vpack.c.b16 %v55, %v47
  %v72 = vpack.c.b16 %v56, %v48
  %v73 = vpack.c.b16 %v57, %v49
  %v74 = vpack.c.b16 %v58, %v50
  %v75 = vpack.c.b16 %v59, %v51
  %v76 = vpack.c.b16 %v60, %v52
  %v77 = vpack.c.b16 %v61, %v53
  %v78 = vpack.c.b16 %v62, %v62
  %v79 = vpack.c.b16 %v63, %v63
  %v80 = vpack.c.b16 %v64, %v64
  %v81 = vpack.c.b16 %v65, %v65
  %v82 = vpack.c.b16 %v66, %v66
  %v83 = vpack.c.b16 %v67, %v67
  %v84 = vpack.c.b16 %v68, %v68
  %v85 = vpack.c.b16 %v69, %v69
  %102 = vmatprep.subr.bf16.mxu0 %v71
  %103 = vmatpush1.bf16.xpose.msra.mxu0 %v70
  %104 = vmatprep.subr.bf16.mxu0 %v79
  %105 = vmatpush1.bf16.xpose.msra.mxu0 %v78
  %106 = vmatprep.subr.bf16.mxu0 0
  %107 = vmatpush1.bf16.xpose.msra.mxu0 0
  %108 = vmatprep.subr.bf16.mxu0 0
  %109 = vmatpush1.bf16.xpose.msra.mxu0 0
  %110 = vmatprep.subr.bf16.mxu0 0
  %111 = vmatpush1.bf16.xpose.msra.mxu0 0
  %112 = vmatprep.subr.bf16.mxu0 0
  %113 = vmatpush1.bf16.xpose.msra.mxu0 0
  %114 = vmatprep.subr.bf16.mxu0 0
  %115 = vmatpush1.bf16.xpose.msra.mxu0 0
  %116 = vmatprep.subr.bf16.mxu0 0
  %117 = vmatpush1.bf16.xpose.msra.mxu0 0
  %118 = vmatprep.subr.bf16.mxu0 0
  %119 = vmatpush1.bf16.xpose.msra.mxu0 0
  %120 = vmatprep.subr.bf16.mxu0 0
  %121 = vmatpush1.bf16.xpose.msra.mxu0 0
  %122 = vmatprep.subr.bf16.mxu0 0
  %123 = vmatpush1.bf16.xpose.msra.mxu0 0
  %124 = vmatprep.subr.bf16.mxu0 0
  %125 = vmatpush1.bf16.xpose.msra.mxu0 0
  %126 = vmatprep.subr.bf16.mxu0 0
  %127 = vmatpush1.bf16.xpose.msra.mxu0 0
  %128 = vmatprep.subr.bf16.mxu0 0
  %129 = vmatpush1.bf16.xpose.msra.mxu0 0
  %130 = vmatprep.subr.bf16.mxu0 0
  %131 = vmatpush1.bf16.xpose.msra.mxu0 0
  %132 = vmatprep.subr.bf16.mxu0 0
  %133 = vmatpush1.bf16.xpose.msra.mxu0 0
  %134 = vmatprep.mubr.bf16.mxu0 %v71
  %135 = vmatmul.mubr.bf16.gmra.mrb[0].mxu0 %v70
  %v136 = vpop.f32.mrb[0].mxu0
  %v137 = vadd.f32 0.0, %v136
  %v138 = vpop.f32.mrb[0].mxu0
  %v139 = vpop.f32.mrb[0].mxu0
  %v140 = vpop.f32.mrb[0].mxu0
  %141 = vmatprep.mubr.bf16.mxu0 %v79
  %142 = vmatmul.mubr.bf16.gmra.mrb[0].mxu0 %v78
  %v143 = vpop.f32.mrb[0].mxu0
  %v144 = vadd.f32 0.0, %v143
  %v145 = vpop.f32.mrb[0].mxu0
  %v146 = vpop.f32.mrb[0].mxu0
  %v147 = vpop.f32.mrb[0].mxu0
  %148 = vdwg.mxu0
  %149 = vmatprep.subr.bf16.mxu0 %v73
  %150 = vmatpush1.bf16.xpose.msra.mxu0 %v72
  %151 = vmatprep.subr.bf16.mxu0 %v81
  %152 = vmatpush1.bf16.xpose.msra.mxu0 %v80
  %153 = vmatprep.subr.bf16.mxu0 0
  %154 = vmatpush1.bf16.xpose.msra.mxu0 0
  %155 = vmatprep.subr.bf16.mxu0 0
  %156 = vmatpush1.bf16.xpose.msra.mxu0 0
  %157 = vmatprep.subr.bf16.mxu0 0
  %158 = vmatpush1.bf16.xpose.msra.mxu0 0
  %159 = vmatprep.subr.bf16.mxu0 0
  %160 = vmatpush1.bf16.xpose.msra.mxu0 0
  %161 = vmatprep.subr.bf16.mxu0 0
  %162 = vmatpush1.bf16.xpose.msra.mxu0 0
  %163 = vmatprep.subr.bf16.mxu0 0
  %164 = vmatpush1.bf16.xpose.msra.mxu0 0
  %165 = vmatprep.subr.bf16.mxu0 0
  %166 = vmatpush1.bf16.xpose.msra.mxu0 0
  %167 = vmatprep.subr.bf16.mxu0 0
  %168 = vmatpush1.bf16.xpose.msra.mxu0 0
  %169 = vmatprep.subr.bf16.mxu0 0
  %170 = vmatpush1.bf16.xpose.msra.mxu0 0
  %171 = vmatprep.subr.bf16.mxu0 0
  %172 = vmatpush1.bf16.xpose.msra.mxu0 0
  %173 = vmatprep.subr.bf16.mxu0 0
  %174 = vmatpush1.bf16.xpose.msra.mxu0 0
  %175 = vmatprep.subr.bf16.mxu0 0
  %176 = vmatpush1.bf16.xpose.msra.mxu0 0
  %177 = vmatprep.subr.bf16.mxu0 0
  %178 = vmatpush1.bf16.xpose.msra.mxu0 0
  %179 = vmatprep.subr.bf16.mxu0 0
  %180 = vmatpush1.bf16.xpose.msra.mxu0 0
  %181 = vmatprep.mubr.bf16.mxu0 %v73
  %182 = vmatmul.mubr.bf16.gmra.mrb[0].mxu0 %v72
  %v183 = vpop.f32.mrb[0].mxu0
  %v184 = vadd.f32 %v137, %v183
  %v185 = vpop.f32.mrb[0].mxu0
  %v186 = vpop.f32.mrb[0].mxu0
  %v187 = vpop.f32.mrb[0].mxu0
  %188 = vmatprep.mubr.bf16.mxu0 %v81
  %189 = vmatmul.mubr.bf16.gmra.mrb[0].mxu0 %v80
  %v190 = vpop.f32.mrb[0].mxu0
  %v191 = vadd.f32 %v144, %v190
  %v192 = vpop.f32.mrb[0].mxu0
  %v193 = vpop.f32.mrb[0].mxu0
  %v194 = vpop.f32.mrb[0].mxu0
  %195 = vdwg.mxu0
  %196 = vmatprep.subr.bf16.mxu0 %v75
  %197 = vmatpush1.bf16.xpose.msra.mxu0 %v74
  %198 = vmatprep.subr.bf16.mxu0 %v83
  %199 = vmatpush1.bf16.xpose.msra.mxu0 %v82
  %200 = vmatprep.subr.bf16.mxu0 0
  %201 = vmatpush1.bf16.xpose.msra.mxu0 0
  %202 = vmatprep.subr.bf16.mxu0 0
  %203 = vmatpush1.bf16.xpose.msra.mxu0 0
  %204 = vmatprep.subr.bf16.mxu0 0
  %205 = vmatpush1.bf16.xpose.msra.mxu0 0
  %206 = vmatprep.subr.bf16.mxu0 0
  %207 = vmatpush1.bf16.xpose.msra.mxu0 0
  %208 = vmatprep.subr.bf16.mxu0 0
  %209 = vmatpush1.bf16.xpose.msra.mxu0 0
  %210 = vmatprep.subr.bf16.mxu0 0
  %211 = vmatpush1.bf16.xpose.msra.mxu0 0
  %212 = vmatprep.subr.bf16.mxu0 0
  %213 = vmatpush1.bf16.xpose.msra.mxu0 0
  %214 = vmatprep.subr.bf16.mxu0 0
  %215 = vmatpush1.bf16.xpose.msra.mxu0 0
  %216 = vmatprep.subr.bf16.mxu0 0
  %217 = vmatpush1.bf16.xpose.msra.mxu0 0
  %218 = vmatprep.subr.bf16.mxu0 0
  %219 = vmatpush1.bf16.xpose.msra.mxu0 0
  %220 = vmatprep.subr.bf16.mxu0 0
  %221 = vmatpush1.bf16.xpose.msra.mxu0 0
  %222 = vmatprep.subr.bf16.mxu0 0
  %223 = vmatpush1.bf16.xpose.msra.mxu0 0
  %224 = vmatprep.subr.bf16.mxu0 0
  %225 = vmatpush1.bf16.xpose.msra.mxu0 0
  %226 = vmatprep.subr.bf16.mxu0 0
  %227 = vmatpush1.bf16.xpose.msra.mxu0 0
  %228 = vmatprep.mubr.bf16.mxu0 %v75
  %229 = vmatmul.mubr.bf16.gmra.mrb[0].mxu0 %v74
  %v230 = vpop.f32.mrb[0].mxu0
  %v231 = vadd.f32 %v184, %v230
  %v232 = vpop.f32.mrb[0].mxu0
  %v233 = vpop.f32.mrb[0].mxu0
  %v234 = vpop.f32.mrb[0].mxu0
  %235 = vmatprep.mubr.bf16.mxu0 %v83
  %236 = vmatmul.mubr.bf16.gmra.mrb[0].mxu0 %v82
  %v237 = vpop.f32.mrb[0].mxu0
  %v238 = vadd.f32 %v191, %v237
  %v239 = vpop.f32.mrb[0].mxu0
  %v240 = vpop.f32.mrb[0].mxu0
  %v241 = vpop.f32.mrb[0].mxu0
  %242 = vdwg.mxu0
  %243 = vmatprep.subr.bf16.mxu0 %v77
  %244 = vmatpush1.bf16.xpose.msra.mxu0 %v76
  %245 = vmatprep.subr.bf16.mxu0 %v85
  %246 = vmatpush1.bf16.xpose.msra.mxu0 %v84
  %247 = vmatprep.subr.bf16.mxu0 0
  %248 = vmatpush1.bf16.xpose.msra.mxu0 0
  %249 = vmatprep.subr.bf16.mxu0 0
  %250 = vmatpush1.bf16.xpose.msra.mxu0 0
  %251 = vmatprep.subr.bf16.mxu0 0
  %252 = vmatpush1.bf16.xpose.msra.mxu0 0
  %253 = vmatprep.subr.bf16.mxu0 0
  %254 = vmatpush1.bf16.xpose.msra.mxu0 0
  %255 = vmatprep.subr.bf16.mxu0 0
  %256 = vmatpush1.bf16.xpose.msra.mxu0 0
  %257 = vmatprep.subr.bf16.mxu0 0
  %258 = vmatpush1.bf16.xpose.msra.mxu0 0
  %259 = vmatprep.subr.bf16.mxu0 0
  %260 = vmatpush1.bf16.xpose.msra.mxu0 0
  %261 = vmatprep.subr.bf16.mxu0 0
  %262 = vmatpush1.bf16.xpose.msra.mxu0 0
  %263 = vmatprep.subr.bf16.mxu0 0
  %264 = vmatpush1.bf16.xpose.msra.mxu0 0
  %265 = vmatprep.subr.bf16.mxu0 0
  %266 = vmatpush1.bf16.xpose.msra.mxu0 0
  %267 = vmatprep.subr.bf16.mxu0 0
  %268 = vmatpush1.bf16.xpose.msra.mxu0 0
  %269 = vmatprep.subr.bf16.mxu0 0
  %270 = vmatpush1.bf16.xpose.msra.mxu0 0
  %271 = vmatprep.subr.bf16.mxu0 0
  %272 = vmatpush1.bf16.xpose.msra.mxu0 0
  %273 = vmatprep.subr.bf16.mxu0 0
  %274 = vmatpush1.bf16.xpose.msra.mxu0 0
  %275 = vmatprep.mubr.bf16.mxu0 %v77
  %276 = vmatmul.mubr.bf16.gmra.mrb[0].mxu0 %v76
  %v277 = vpop.f32.mrb[0].mxu0
  %v278 = vadd.f32 %v231, %v277
  %v279 = vpop.f32.mrb[0].mxu0
  %v280 = vpop.f32.mrb[0].mxu0
  %v281 = vpop.f32.mrb[0].mxu0
  %282 = vmatprep.mubr.bf16.mxu0 %v85
  %283 = vmatmul.mubr.bf16.gmra.mrb[0].mxu0 %v84
  %v284 = vpop.f32.mrb[0].mxu0
  %v285 = vadd.f32 %v238, %v284
  %v286 = vpop.f32.mrb[0].mxu0
  %v287 = vpop.f32.mrb[0].mxu0
  %v288 = vpop.f32.mrb[0].mxu0
  %289 = vdwg.mxu0
  %s290 = sld [smem:[#allocation2]]
  %v291 = vld [vmem:[%s1] sm:$0x1]
  %v292 = vld [vmem:[%s2] sm:$0xf]
  %v293 = vld [vmem:[%s3] sm:$0x1]
  %v294 = vmul.f32 %v278, 0.0
  %vm295 = vcmask 27648
  %v296 = vsel %vm295, %v294, 0.0
  %297 = vadd.xlane.f32.xlu0 %v296
  %v298 = vpop.xlane.xlu0 %297
  %v299 = vrot.slane %v296, 4
  %v300 = vadd.f32 %v296, %v299
  %v301 = vrot.slane %v300, 2
  %v302 = vadd.f32 %v300, %v301
  %v303 = vrot.slane %v302, 1
  %v304 = vadd.f32 %v302, %v303
  %v305 = vadd.f32 %v278, %v298
  %v306 = vstv %s290
  %v307 = vadd.f32 %v305, %v306
  %309 = vrot.lane.b32.xlu0 %v292, 16
  %v310 = vpop.permute.xlu0 %309
  %v312 = vsub.f32 %v307, %v310
  %v313 = vadd.f32 %v285, %v304
  %v314 = vadd.f32 %v313, %v306
  %v315 = vsub.f32 %v314, %v291
  %v316 = vmul.f32 %v312, 0.005
  %v317 = vsub.f32 0.0, %v316
  %v318 = vmul.f32 %v315, 0.005
  %v319 = vsub.f32 0.0, %v318
  %vm320 = vcmask 24576
  %v321 = vsel %vm320, %v315, 0.0
  %322 = vadd.xlane.f32.xlu0 %v321
  %v323 = vpop.xlane.xlu0 %322
  %v324 = vrot.slane %v323, 4
  %v325 = vadd.f32 %v323, %v324
  %v326 = vrot.slane %v325, 2
  %v327 = vadd.f32 %v325, %v326
  %v328 = vrot.slane %v327, 1
  %v329 = vadd.f32 %v327, %v328
  %s330 = vtos %v329
  %s331 = smul.f32 %s330, 0.005
  %s332 = ssub.f32 %s290, %s331
  %v333 = vlaneseq
  %v334 = vshrl.u32 %v333, 7
  %v335 = vsub.s32 0, %v334
  %v336 = vrot.slane %v319, %v335
  %v337 = vmul.f32 %v278, %v336
  %v338 = vsel %vm295, %v337, 0.0
  %339 = vadd.xlane.f32.xlu0 %v338
  %v340 = vpop.xlane.xlu0 %339
  %342 = vset.pattern.permute.xlu0 16
  %343 = vperm.xlu0 %342, %v317
  %v344 = vpop.permute.xlu0 %343
  %v346 = vmul.f32 %v278, %v344
  %v347 = vsel %vm295, %v346, 0.0
  %v348 = vrot.slane %v347, 4
  %v349 = vadd.f32 %v347, %v348
  %v350 = vrot.slane %v349, 2
  %v351 = vadd.f32 %v349, %v350
  %v352 = vrot.slane %v351, 1
  %v353 = vadd.f32 %v351, %v352
  %v354 = vadd.f32 %v278, %v340
  %v355 = vstv %s332
  %v356 = vadd.f32 %v354, %v355
  %v357 = vsub.f32 %v356, %v310
  %v358 = vadd.f32 %v285, %v353
  %v359 = vadd.f32 %v358, %v355
  %v360 = vsub.f32 %v359, %v291
  %v361 = vmul.f32 %v357, 0.005
  %v362 = vsub.f32 %v317, %v361
  %v363 = vmul.f32 %v360, 0.005
  %v364 = vsub.f32 %v319, %v363
  %v365 = vsel %vm320, %v360, 0.0
  %366 = vadd.xlane.f32.xlu0 %v365
  %v367 = vpop.xlane.xlu0 %366
  %v368 = vrot.slane %v367, 4
  %v369 = vadd.f32 %v367, %v368
  %v370 = vrot.slane %v369, 2
  %v371 = vadd.f32 %v369, %v370
  %v372 = vrot.slane %v371, 1
  %v373 = vadd.f32 %v371, %v372
  %s374 = vtos %v373
  %s375 = smul.f32 %s374, 0.005
  %s376 = ssub.f32 %s332, %s375
  %v377 = vlaneseq
  %v378 = vshrl.u32 %v377, 7
  %v379 = vsub.s32 0, %v378
  %v380 = vrot.slane %v364, %v379
  %v381 = vmul.f32 %v278, %v380
  %v382 = vsel %vm295, %v381, 0.0
  %383 = vadd.xlane.f32.xlu0 %v382
  %v384 = vpop.xlane.xlu0 %383
  %386 = vset.pattern.permute.xlu0 16
  %387 = vperm.xlu0 %386, %v362
  %v388 = vpop.permute.xlu0 %387
  %v390 = vmul.f32 %v278, %v388
  %v391 = vsel %vm295, %v390, 0.0
  %v392 = vrot.slane %v391, 4
  %v393 = vadd.f32 %v391, %v392
  %v394 = vrot.slane %v393, 2
  %v395 = vadd.f32 %v393, %v394
  %v396 = vrot.slane %v395, 1
  %v397 = vadd.f32 %v395, %v396
  %v398 = vadd.f32 %v278, %v384
  %v399 = vstv %s376
  %v400 = vadd.f32 %v398, %v399
  %v401 = vsub.f32 %v400, %v310
  %v402 = vadd.f32 %v285, %v397
  %v403 = vadd.f32 %v402, %v399
  %v404 = vsub.f32 %v403, %v291
  %v405 = vmul.f32 %v401, 0.005
  %v406 = vsub.f32 %v362, %v405
  %v407 = vsel %vm320, %v404, 0.0
  %408 = vadd.xlane.f32.xlu0 %v407
  %v409 = vpop.xlane.xlu0 %408
  %v410 = vrot.slane %v409, 4
  %v411 = vadd.f32 %v409, %v410
  %v412 = vrot.slane %v411, 2
  %v413 = vadd.f32 %v411, %v412
  %v414 = vrot.slane %v413, 1
  %v415 = vadd.f32 %v413, %v414
  %s416 = vtos %v415
  %s417 = smul.f32 %s416, 0.005
  %s418 = ssub.f32 %s376, %s417
  %420 = vset.pattern.permute.xlu0 16
  %421 = vperm.xlu0 %420, %v406
  %v422 = vpop.permute.xlu0 %421
  %v424 = vmul.f32 %v278, %v422
  %vm425 = vcmask 93248
  %v426 = vsel %vm425, %v424, 0.0
  %v427 = vrot.slane %v426, 4
  %v428 = vadd.f32 %v426, %v427
  %v429 = vrot.slane %v428, 2
  %v430 = vadd.f32 %v428, %v429
  %v431 = vrot.slane %v430, 1
  %v432 = vadd.f32 %v430, %v431
  %v433 = vadd.f32 %v285, %v432
  %v434 = vstv %s418
  %v435 = vadd.f32 %v433, %v434
  %v437 = vlaneseq
  %v438 = vshrl.u32 %v437, 7
  %v439 = vsub.s32 0, %v438
  %v440 = vrot.slane %v293, %v439
  %441 = vrot.lane.b32.xlu0 %v440, 8
  %v442 = vpop.permute.xlu0 %441
  %v444 = vsub.f32 %v435, %v442
  %v445 = vmul.f32 %v444, %v444
  %447 = vrot.lane.b32.xlu0 %v445, 120
  %v448 = vpop.permute.xlu0 %447
  %v450 = vsel %vm320, %v448, 0.0
  %451 = vadd.xlane.f32.xlu0 %v450
  %v452 = vpop.xlane.xlu0 %451
  %v453 = vrot.slane %v452, 4
  %v454 = vadd.f32 %v452, %v453
  %v455 = vrot.slane %v454, 2
  %v456 = vadd.f32 %v454, %v455
  %v457 = vrot.slane %v456, 1
  %v458 = vadd.f32 %v456, %v457
  %s459 = vtos %v458
  %v460 = vrcp.pop 4.0
  %s461 = vtos %v460
  %s462 = smul.f32 %s459, %s461
  %s463 = sadd.f32 %s462, 0.0
  %s464 = scalar_lea.vmem %s1, 1
  %v465 = vld [vmem:[%s464] sm:$0x1]
  %s466 = scalar_lea.vmem %s2, 4
  %v467 = vld [vmem:[%s466] sm:$0xf]
  %s468 = scalar_lea.vmem %s3, 1
  %v469 = vld [vmem:[%s468] sm:$0x1]
  %471 = vrot.lane.b32.xlu0 %v294, 124
  %v472 = vpop.permute.xlu0 %471
  %vm474 = vcmask 31748
  %v475 = vsel %vm474, %v472, 0.0
  %476 = vadd.xlane.f32.xlu0 %v475
  %v477 = vpop.xlane.xlu0 %476
  %v478 = vrot.slane %v294, 4
  %vm480 = vcmask 60448
  %v481 = vsel %vm480, %v478, 0.0
  %v482 = vrot.slane %v481, 4
  %v483 = vadd.f32 %v481, %v482
  %v484 = vrot.slane %v483, 2
  %v485 = vadd.f32 %v483, %v484
  %v486 = vrot.slane %v485, 1
  %v487 = vadd.f32 %v485, %v486
  %v488 = vadd.f32 %v278, %v477
  %v489 = vadd.f32 %v488, %v306
  %v491 = vrot.slane %v467, 4
  %492 = vrot.lane.b32.xlu0 %v491, 16
  %v493 = vpop.permute.xlu0 %492
  %v495 = vsub.f32 %v489, %v493
  %v496 = vadd.f32 %v285, %v487
  %v497 = vadd.f32 %v496, %v306
  %v499 = vlaneseq
  %v500 = vshrl.u32 %v499, 7
  %v501 = vsub.s32 0, %v500
  %v502 = vrot.slane %v465, %v501
  %503 = vrot.lane.b32.xlu0 %v502, 4
  %v504 = vpop.permute.xlu0 %503
  %v506 = vsub.f32 %v497, %v504
  %v507 = vmul.f32 %v495, 0.005
  %v508 = vsub.f32 0.0, %v507
  %v509 = vmul.f32 %v506, 0.005
  %v510 = vsub.f32 0.0, %v509
  %512 = vrot.lane.b32.xlu0 %v506, 124
  %v513 = vpop.permute.xlu0 %512
  %v515 = vsel %vm320, %v513, 0.0
  %516 = vadd.xlane.f32.xlu0 %v515
  %v517 = vpop.xlane.xlu0 %516
  %v518 = vrot.slane %v517, 4
  %v519 = vadd.f32 %v517, %v518
  %v520 = vrot.slane %v519, 2
  %v521 = vadd.f32 %v519, %v520
  %v522 = vrot.slane %v521, 1
  %v523 = vadd.f32 %v521, %v522
  %s524 = vtos %v523
  %s525 = smul.f32 %s524, 0.005
  %s526 = ssub.f32 %s290, %s525
  %v527 = vlaneseq
  %v528 = vshrl.u32 %v527, 7
  %v529 = vsub.s32 0, %v528
  %v530 = vrot.slane %v510, %v529
  %v531 = vmul.f32 %v278, %v530
  %533 = vrot.lane.b32.xlu0 %v531, 124
  %v534 = vpop.permute.xlu0 %533
  %v536 = vsel %vm474, %v534, 0.0
  %537 = vadd.xlane.f32.xlu0 %v536
  %v538 = vpop.xlane.xlu0 %537
  %540 = vset.pattern.permute.xlu0 16
  %541 = vperm.xlu0 %540, %v508
  %v542 = vpop.permute.xlu0 %541
  %v544 = vmul.f32 %v278, %v542
  %v546 = vrot.slane %v544, 4
  %v548 = vsel %vm480, %v546, 0.0
  %v549 = vrot.slane %v548, 4
  %v550 = vadd.f32 %v548, %v549
  %v551 = vrot.slane %v550, 2
  %v552 = vadd.f32 %v550, %v551
  %v553 = vrot.slane %v552, 1
  %v554 = vadd.f32 %v552, %v553
  %v555 = vadd.f32 %v278, %v538
  %v556 = vstv %s526
  %v557 = vadd.f32 %v555, %v556
  %v558 = vsub.f32 %v557, %v493
  %v559 = vadd.f32 %v285, %v554
  %v560 = vadd.f32 %v559, %v556
  %v561 = vsub.f32 %v560, %v504
  %v562 = vmul.f32 %v558, 0.005
  %v563 = vsub.f32 %v508, %v562
  %v564 = vmul.f32 %v561, 0.005
  %v565 = vsub.f32 %v510, %v564
  %567 = vrot.lane.b32.xlu0 %v561, 124
  %v568 = vpop.permute.xlu0 %567
  %v570 = vsel %vm320, %v568, 0.0
  %571 = vadd.xlane.f32.xlu0 %v570
  %v572 = vpop.xlane.xlu0 %571
  %v573 = vrot.slane %v572, 4
  %v574 = vadd.f32 %v572, %v573
  %v575 = vrot.slane %v574, 2
  %v576 = vadd.f32 %v574, %v575
  %v577 = vrot.slane %v576, 1
  %v578 = vadd.f32 %v576, %v577
  %s579 = vtos %v578
  %s580 = smul.f32 %s579, 0.005
  %s581 = ssub.f32 %s526, %s580
  %v582 = vlaneseq
  %v583 = vshrl.u32 %v582, 7
  %v584 = vsub.s32 0, %v583
  %v585 = vrot.slane %v565, %v584
  %v586 = vmul.f32 %v278, %v585
  %588 = vrot.lane.b32.xlu0 %v586, 124
  %v589 = vpop.permute.xlu0 %588
  %v591 = vsel %vm474, %v589, 0.0
  %592 = vadd.xlane.f32.xlu0 %v591
  %v593 = vpop.xlane.xlu0 %592
  %595 = vset.pattern.permute.xlu0 16
  %596 = vperm.xlu0 %595, %v563
  %v597 = vpop.permute.xlu0 %596
  %v599 = vmul.f32 %v278, %v597
  %v601 = vrot.slane %v599, 4
  %v603 = vsel %vm480, %v601, 0.0
  %v604 = vrot.slane %v603, 4
  %v605 = vadd.f32 %v603, %v604
  %v606 = vrot.slane %v605, 2
  %v607 = vadd.f32 %v605, %v606
  %v608 = vrot.slane %v607, 1
  %v609 = vadd.f32 %v607, %v608
  %v610 = vadd.f32 %v278, %v593
  %v611 = vstv %s581
  %v612 = vadd.f32 %v610, %v611
  %v613 = vsub.f32 %v612, %v493
  %v614 = vadd.f32 %v285, %v609
  %v615 = vadd.f32 %v614, %v611
  %v616 = vsub.f32 %v615, %v504
  %v617 = vmul.f32 %v613, 0.005
  %v618 = vsub.f32 %v563, %v617
  %620 = vrot.lane.b32.xlu0 %v616, 124
  %v621 = vpop.permute.xlu0 %620
  %v623 = vsel %vm320, %v621, 0.0
  %624 = vadd.xlane.f32.xlu0 %v623
  %v625 = vpop.xlane.xlu0 %624
  %v626 = vrot.slane %v625, 4
  %v627 = vadd.f32 %v625, %v626
  %v628 = vrot.slane %v627, 2
  %v629 = vadd.f32 %v627, %v628
  %v630 = vrot.slane %v629, 1
  %v631 = vadd.f32 %v629, %v630
  %s632 = vtos %v631
  %s633 = smul.f32 %s632, 0.005
  %s634 = ssub.f32 %s581, %s633
  %636 = vset.pattern.permute.xlu0 16
  %637 = vperm.xlu0 %636, %v618
  %v638 = vpop.permute.xlu0 %637
  %v640 = vmul.f32 %v278, %v638
  %v642 = vrot.slane %v640, 4
  %vm644 = vcmask 126048
  %v645 = vsel %vm644, %v642, 0.0
  %v646 = vrot.slane %v645, 4
  %v647 = vadd.f32 %v645, %v646
  %v648 = vrot.slane %v647, 2
  %v649 = vadd.f32 %v647, %v648
  %v650 = vrot.slane %v649, 1
  %v651 = vadd.f32 %v649, %v650
  %v652 = vadd.f32 %v285, %v651
  %v653 = vstv %s634
  %v654 = vadd.f32 %v652, %v653
  %v656 = vlaneseq
  %v657 = vshrl.u32 %v656, 7
  %v658 = vsub.s32 0, %v657
  %v659 = vrot.slane %v469, %v658
  %660 = vrot.lane.b32.xlu0 %v659, 12
  %v661 = vpop.permute.xlu0 %660
  %v663 = vsub.f32 %v654, %v661
  %v664 = vmul.f32 %v663, %v663
  %666 = vrot.lane.b32.xlu0 %v664, 116
  %v667 = vpop.permute.xlu0 %666
  %v669 = vsel %vm320, %v667, 0.0
  %670 = vadd.xlane.f32.xlu0 %v669
  %v671 = vpop.xlane.xlu0 %670
  %v672 = vrot.slane %v671, 4
  %v673 = vadd.f32 %v671, %v672
  %v674 = vrot.slane %v673, 2
  %v675 = vadd.f32 %v673, %v674
  %v676 = vrot.slane %v675, 1
  %v677 = vadd.f32 %v675, %v676
  %s678 = vtos %v677
  %v679 = vrcp.pop 4.0
  %s680 = vtos %v679
  %s681 = smul.f32 %s678, %s680
  %s682 = sadd.f32 %s463, %s681
  %v683 = vstv %s682
  %684 = vst [vmem:[%s5] sm:$0xff] %v683
  // Predicated region
  $region22: #{maml_forward.1} parent=0 // pred_check
    _
  $region23: #{maml_forward.1} parent=0 // pred_check_branch
    %686 = sbr.rel (0) target = $region25
  $region24: #{maml_forward.1} parent=0 // pred_region
    _
  $region25: #{maml_forward.1} parent=0 // pred_fallthru
    _
  // Predicated region
  $region26: #{maml_forward.1} parent=0 // pred_check
    _
  $region27: #{maml_forward.1} parent=0 // pred_check_branch
    %688 = sbr.rel (0) target = $region29
  $region28: #{maml_forward.1} parent=0 // pred_region
    _
  $region29: #{maml_forward.1} parent=0 // pred_fallthru
    _

</llo_original>
